<compile_context>
chip_gen: v6e
topology: v6e:2x2x1
jax: 0.10.0
libtpu: 0.0.40
codegen_flags: <defaults>
</compile_context>

<pallas_src>
import functools

import jax
import jax.numpy as jnp
from jax import lax
from jax.experimental import pallas as pl
from jax.experimental.pallas import tpu as pltpu


def _round_up(x, m):
    return ((x + m - 1) // m) * m


def _default_num_cores():
    # 2 TensorCores per chip only on v7x; v5e/v6e are single-TC.
    try:
        dev = jax.devices()[0]
        n = getattr(dev, "num_cores", None)
        if n is None:
            kind = str(getattr(dev, "device_kind", "")).lower()
            n = 2 if "v7" in kind else 1
        return max(1, int(n))
    except Exception:
        return 1


def _focal_ce_partial_kernel(x_ref, labels_ref, out_ref, *, n_rows, tiles_per_core):
    """Accumulate the sum of per-row NLL (-log softmax[label]) into a per-core block."""
    j = pl.program_id(1)

    @pl.when(j == 0)
    def _init():
        out_ref[...] = jnp.zeros_like(out_ref)

    x = x_ref[...].astype(jnp.float32)          # (TM, C) logits, cast after DMA
    labels = labels_ref[...]                    # (TM, 1) int32
    tm, c = x.shape

    # Numerically stable log-sum-exp over the true (unpadded) class dim.
    row_max = jnp.max(x, axis=-1, keepdims=True)                 # (TM, 1)
    shifted = x - row_max                                        # (TM, C)
    sum_exp = jnp.sum(jnp.exp(shifted), axis=-1, keepdims=True)  # (TM, 1)

    # Label gather via select-and-sum on the VPU (no one-hot multiply, no MXU).
    class_ids = lax.broadcasted_iota(jnp.int32, (1, c), 1)       # (1, C)
    label_shifted = jnp.sum(jnp.where(class_ids == labels, shifted, 0.0),
                            axis=-1, keepdims=True)              # (TM, 1)
    nll = jnp.log(sum_exp) - label_shifted                       # (TM, 1) = -log p(label)

    # Mask rows past the true batch (ragged last tile / clamped duplicate tile).
    # Keep the mask applied to nll so any NaN from DMA-padding garbage is killed here.
    tile_idx = pl.program_id(0) * tiles_per_core + j
    row_ids = tile_idx * tm + lax.broadcasted_iota(jnp.int32, (tm, 1), 0)
    nll = jnp.where(row_ids < n_rows, nll, 0.0)

    # Accumulate this tile's NLL sum into the (resident) per-core output block.
    out_ref[...] += jnp.sum(nll)


def focal_loss(inputs, labels, alpha=1.0, gamma=2.0, *,
               target_tile_bytes=2 * 1024 * 1024,
               num_cores=None,
               vmem_limit_bytes=48 * 1024 * 1024):
    """inputs: (N, C) float logits (native dtype); labels: (N,) integer class indices."""
    n, c = inputs.shape
    labels_2d = labels.astype(jnp.int32).reshape(n, 1)

    if num_cores is None:
        num_cores = _default_num_cores()

    # Size the batch tile by bytes (lane-padded VMEM footprint), multiple of 8 rows.
    itemsize = jnp.dtype(inputs.dtype).itemsize
    c_lanes = _round_up(c, 128)                       # VMEM lane padding of the last dim
    rows = max(8, (target_tile_bytes // (c_lanes * itemsize)) // 8 * 8)

    if n <= rows:
        tm, num_tiles = n, 1                          # full batch: tm == full array dim
    else:
        tm, num_tiles = rows, pl.cdiv(n, rows)        # tm is a multiple of 8

    cores = max(1, min(int(num_cores), num_tiles))
    tiles_per_core = pl.cdiv(num_tiles, cores)
    total_tiles = tiles_per_core * cores

    # Balance across TensorCores: if the whole-tile split would leave one core with a
    # duplicate (clamped + fully-masked) tile, shrink tm so every core gets exactly
    # tiles_per_core real tiles. Falls back to the clamp when it doesn't divide.
    if total_tiles != num_tiles and n > tm:
        tm_bal = _round_up(pl.cdiv(n, total_tiles), 8)
        if pl.cdiv(n, tm_bal) == total_tiles:
            tm, num_tiles = tm_bal, total_tiles

    last_tile = num_tiles - 1

    def in_index(core, j):
        # Clamp keeps a (rare) extra tile in-bounds; its rows are masked in-kernel
        # via the nominal (unclamped) row index.
        return (jnp.minimum(core * tiles_per_core + j, last_tile), 0)

    kernel = functools.partial(_focal_ce_partial_kernel,
                               n_rows=n, tiles_per_core=tiles_per_core)

    partials = pl.pallas_call(
        kernel,
        out_shape=jax.ShapeDtypeStruct((cores * 8, 128), jnp.float32),
        grid=(cores, tiles_per_core),
        in_specs=[
            pl.BlockSpec((tm, c), in_index),   # logits, UNPADDED: last dim == full C
            pl.BlockSpec((tm, 1), in_index),   # labels (tiny HBM traffic vs. logits)
        ],
        out_specs=pl.BlockSpec((8, 128), lambda core, j: (core, 0)),
        compiler_params=pltpu.CompilerParams(
            dimension_semantics=("parallel", "arbitrary"),
            vmem_limit_bytes=vmem_limit_bytes,
        ),
        # TODO(synk): on v7x, if xprof still shows exposed DMA waits after the byte-sized
        # tile, set pipeline_mode=pl.Buffered(3) on the logits BlockSpec.
    )(inputs, labels_2d)

    # Finalize: mean CE over the true batch + scalar focal transform (a few XLA scalar ops).
    per_core = partials.reshape(cores, 8, 128)[:, 0, 0]   # each block is uniform
    ce = jnp.sum(per_core) / jnp.float32(n)
    prob = jnp.exp(-ce)
    one_minus = 1.0 - prob
    g = float(gamma)
    if g == int(g) and g >= 0:
        mod = jnp.float32(1.0)
        for _ in range(int(g)):                           # gamma=2 -> explicit square
            mod = mod * one_minus
    else:
        mod = jnp.power(one_minus, jnp.float32(g))
    return jnp.float32(alpha) * mod * ce


def _reference_focal_loss(inputs, labels, alpha=1.0, gamma=2.0):
    # Pure-JAX reference matching torch.nn.CrossEntropyLoss + focal transform.
    logits = inputs.astype(jnp.float32)
    logp_rows = jax.nn.log_softmax(logits, axis=-1)
    nll = -jnp.take_along_axis(logp_rows, labels[:, None].astype(jnp.int32), axis=-1)
    ce = jnp.mean(nll)
    prob = jnp.exp(-ce)
    return alpha * (1.0 - prob) ** gamma * ce


if __name__ == "__main__":
    key = jax.random.PRNGKey(0)
    k1, k2, k3, k4 = jax.random.split(key, 4)

    # Small shapes consistent with a classification loss.
    batch, num_classes = 8, 32
    inputs = jax.random.normal(k1, (batch, num_classes), dtype=jnp.float32)
    labels = jax.random.randint(k2, (batch,), 0, num_classes, dtype=jnp.int32)

    loss = jax.block_until_ready(focal_loss(inputs, labels, alpha=1.0, gamma=2.0))
    ref = _reference_focal_loss(inputs, labels, alpha=1.0, gamma=2.0)
    assert jnp.allclose(loss, ref, rtol=1e-5, atol=1e-6), (loss, ref)

    # Exercise the tiled / multi-core / ragged-masking path with tiny forced tiles.
    n2, c2 = 300, 200
    x2 = jax.random.normal(k3, (n2, c2), dtype=jnp.float32) * 3.0
    y2 = jax.random.randint(k4, (n2,), 0, c2, dtype=jnp.int32)
    loss2 = jax.block_until_ready(focal_loss(x2, y2, target_tile_bytes=4096))
    ref2 = _reference_focal_loss(x2, y2)
    assert jnp.allclose(loss2, ref2, rtol=1e-4, atol=1e-6), (loss2, ref2)

    print("KERNEL_OK")
</pallas_src>

<mosaic_0001>
module attributes {stable_mosaic.version = 11 : i64} {
  func.func @_focal_ce_partial_kernel(%arg0: i32, %arg1: i32, %arg2: memref<8x32xf32, #tpu.memory_space<vmem>>, %arg3: memref<8x1xi32, #tpu.memory_space<vmem>>, %arg4: memref<8x128xf32, #tpu.memory_space<vmem>>) attributes {dimension_semantics = [#tpu.dimension_semantics<parallel>, #tpu.dimension_semantics<arbitrary>], iteration_bounds = array<i64: 1, 1>, scalar_prefetch = 0 : i64, scratch_operands = 0 : i64, tpu.core_type = #tpu.core_type<tc>, window_params = [{transform_indices = @transform_0, window_bounds = array<i64: 8, 32>}, {transform_indices = @transform_1, window_bounds = array<i64: 8, 1>}, {transform_indices = @transform_2, window_bounds = array<i64: 8, 128>}]} {
    %c0_i32 = arith.constant 0 : i32
    %0 = arith.cmpi eq, %arg1, %c0_i32 : i32
    %1 = arith.extui %0 : i1 to i32
    %c0_i32_0 = arith.constant 0 : i32
    %2 = arith.cmpi ne, %1, %c0_i32_0 : i32
    scf.if %2 {
      %cst_14 = arith.constant 0.000000e+00 : f32
      %40 = vector.broadcast %cst_14 : f32 to vector<8x128xf32>
      %c0_15 = arith.constant 0 : index
      %c0_16 = arith.constant 0 : index
      %41 = vector.load %arg4[%c0_15, %c0_16] : memref<8x128xf32, #tpu.memory_space<vmem>>, vector<8x128xf32>
      tpu.vector_store %arg4[%c0_15, %c0_16], %40 {strides = array<i32>} : memref<8x128xf32, #tpu.memory_space<vmem>>, vector<8x128xf32>,
    } else {
    }
    %c0 = arith.constant 0 : index
    %c0_1 = arith.constant 0 : index
    %3 = vector.load %arg2[%c0, %c0_1] : memref<8x32xf32, #tpu.memory_space<vmem>>, vector<8x32xf32>
    %c0_2 = arith.constant 0 : index
    %c0_3 = arith.constant 0 : index
    %4 = vector.load %arg3[%c0_2, %c0_3] : memref<8x1xi32, #tpu.memory_space<vmem>>, vector<8x1xi32>
    %cst = arith.constant dense<0xFF800000> : vector<8xf32>
    %5 = vector.multi_reduction <maximumf>, %3, %cst [1] : vector<8x32xf32> to vector<8xf32>
    %6 = vector.shape_cast %5 : vector<8xf32> to vector<8x1xf32>
    %7 = vector.broadcast %6 : vector<8x1xf32> to vector<8x32xf32>
    %8 = arith.subf %3, %7 : vector<8x32xf32>
    %9 = math.exp %8 : vector<8x32xf32>
    %cst_4 = arith.constant dense<0.000000e+00> : vector<8xf32>
    %10 = vector.multi_reduction <add>, %9, %cst_4 [1] : vector<8x32xf32> to vector<8xf32>
    %11 = vector.shape_cast %10 : vector<8xf32> to vector<8x1xf32>
    %12 = tpu.iota {dimensions = array<i32: 1>} : vector<1x32xi32>
    %13 = vector.broadcast %12 : vector<1x32xi32> to vector<8x32xi32>
    %14 = vector.broadcast %4 : vector<8x1xi32> to vector<8x32xi32>
    %15 = arith.cmpi eq, %13, %14 : vector<8x32xi32>
    %cst_5 = arith.constant 0.000000e+00 : f32
    %16 = vector.broadcast %cst_5 : f32 to vector<8x32xf32>
    %17 = arith.select %15, %8, %16 : vector<8x32xi1>, vector<8x32xf32>
    %cst_6 = arith.constant dense<0.000000e+00> : vector<8xf32>
    %18 = vector.multi_reduction <add>, %17, %cst_6 [1] : vector<8x32xf32> to vector<8xf32>
    %19 = vector.shape_cast %18 : vector<8xf32> to vector<8x1xf32>
    %20 = math.log %11 : vector<8x1xf32>
    %21 = arith.subf %20, %19 : vector<8x1xf32>
    %c1_i32 = arith.constant 1 : i32
    %22 = arith.muli %arg0, %c1_i32 : i32
    %23 = arith.addi %22, %arg1 : i32
    %c8_i32 = arith.constant 8 : i32
    %24 = arith.muli %23, %c8_i32 : i32
    %25 = tpu.iota {dimensions = array<i32: 0>} : vector<8x1xi32>
    %26 = vector.broadcast %24 : i32 to vector<8x1xi32>
    %27 = arith.addi %26, %25 : vector<8x1xi32>
    %c8_i32_7 = arith.constant 8 : i32
    %28 = vector.broadcast %c8_i32_7 : i32 to vector<8x1xi32>
    %29 = arith.cmpi slt, %27, %28 : vector<8x1xi32>
    %cst_8 = arith.constant 0.000000e+00 : f32
    %30 = vector.broadcast %cst_8 : f32 to vector<8x1xf32>
    %31 = arith.select %29, %21, %30 : vector<8x1xi1>, vector<8x1xf32>
    %c0_9 = arith.constant 0 : index
    %c0_10 = arith.constant 0 : index
    %32 = vector.load %arg4[%c0_9, %c0_10] : memref<8x128xf32, #tpu.memory_space<vmem>>, vector<8x128xf32>
    %33 = vector.shape_cast %31 : vector<8x1xf32> to vector<1x8x1xf32>
    %cst_11 = arith.constant dense<0.000000e+00> : vector<1xf32>
    %34 = vector.multi_reduction <add>, %33, %cst_11 [1, 2] : vector<1x8x1xf32> to vector<1xf32>
    %35 = vector.shape_cast %34 : vector<1xf32> to vector<1x1x1xf32>
    %36 = vector.extract %35[0, 0, 0] : f32 from vector<1x1x1xf32>
    %37 = vector.broadcast %36 : f32 to vector<8x128xf32>
    %38 = arith.addf %32, %37 : vector<8x128xf32>
    %c0_12 = arith.constant 0 : index
    %c0_13 = arith.constant 0 : index
    %39 = vector.load %arg4[%c0_12, %c0_13] : memref<8x128xf32, #tpu.memory_space<vmem>>, vector<8x128xf32>
    tpu.vector_store %arg4[%c0_12, %c0_13], %38 {strides = array<i32>} : memref<8x128xf32, #tpu.memory_space<vmem>>, vector<8x128xf32>,
    return
  }
  func.func @transform_0(%arg0: i32, %arg1: i32) -> (i32, i32) {
    %c1_i32 = arith.constant 1 : i32
    %0 = arith.muli %arg0, %c1_i32 : i32
    %1 = arith.addi %0, %arg1 : i32
    %c0_i32 = arith.constant 0 : i32
    %2 = arith.minsi %1, %c0_i32 : i32
    %c0_i32_0 = arith.constant 0 : i32
    %c0_i32_1 = arith.constant 0 : i32
    return %2, %c0_i32_0 : i32, i32
  }
  func.func @transform_1(%arg0: i32, %arg1: i32) -> (i32, i32) {
    %c1_i32 = arith.constant 1 : i32
    %0 = arith.muli %arg0, %c1_i32 : i32
    %1 = arith.addi %0, %arg1 : i32
    %c0_i32 = arith.constant 0 : i32
    %2 = arith.minsi %1, %c0_i32 : i32
    %c0_i32_0 = arith.constant 0 : i32
    %c0_i32_1 = arith.constant 0 : i32
    return %2, %c0_i32_0 : i32, i32
  }
  func.func @transform_2(%arg0: i32, %arg1: i32) -> (i32, i32) {
    %c0_i32 = arith.constant 0 : i32
    %c0_i32_0 = arith.constant 0 : i32
    return %arg0, %c0_i32 : i32, i32
  }
}

</mosaic_0001>

<llo_original>
// kernel: tpu_custom_call.1
$region0: #{tpu_custom_call.1}
  #allocation0 [shape = 'u32[]', space=smem, size = 0x4, offset = 0x4, fixed_abs, tag = 'smem constant byte address 0x4 - core index']
  #allocation1 [shape = 'u32[144,128]{1,0:T(1,128)}', space=vmem, size = 0x12000, scoped, tag = 'internal scratch']
  %s0 = inlined_call_operand.vmem [shape: f32[8,32], index: 0, kind: input, shape index: {}]
  %s1 = inlined_call_operand.vmem [shape: s32[8,1], index: 1, kind: input, shape index: {}]
  %s2 = inlined_call_operand.hbm [shape: f32[8,128], index: 2, kind: output, shape index: {}]
  %s3 = sld [smem:[#allocation0]]
  $region22: #{tpu_custom_call.1} parent=0
    _
  %s5 = ssub.s32 1, %s3
  %s6 = scalar_select 0, %s5, %s3
  $region1: #{tpu_custom_call.1} parent=0
    #allocation2 [shape = 'u8[4096]{0}', space=vmem, size = 0x1000, scoped, tag = 'output window, operand 0, single buffered']
    #allocation3 [shape = 's32[1]{0}', space=sflag, size = 0x4, scoped, tag = 'scoped memory for tpu_custom_call.1']
    %7 = vsyncpa [#allocation3], 0
    // Predicated region
    $region2: #{tpu_custom_call.1} parent=1 // pred_check
      _
    $region3: #{tpu_custom_call.1} parent=1 // pred_check_branch
      %9 = sbr.rel (0) target = $region5
    $region4: #{tpu_custom_call.1} parent=1 // pred_region
      %s10 = sadd.s32 0, 0
      %p11 = scmp.lt.s32.totalorder %s10, 0
      %s12 = scalar_select %p11, %s10, 0
      %p13 = scmp.lt.s32.totalorder %s12, 0
      %s14 = scalar_select %p13, %s12, 0
      %s15 = smul.addr %s14, 8
      %s16 = scalar_lea.vmem %s0, %s15
      %s17 = sadd.s32 0, 0
      %p18 = scmp.lt.s32.totalorder %s17, 0
      %s19 = scalar_select %p18, %s17, 0
    $region5: #{tpu_custom_call.1} parent=1 // pred_fallthru
      _
    // Predicated region
    $region6: #{tpu_custom_call.1} parent=1 // pred_check
      _
    $region7: #{tpu_custom_call.1} parent=1 // pred_check_branch
      %21 = sbr.rel (0) target = $region9
    $region8: #{tpu_custom_call.1} parent=1 // pred_region
      %s22 = sadd.s32 0, 0
      %p23 = scmp.lt.s32.totalorder %s22, 0
      %s24 = scalar_select %p23, %s22, 0
      %p25 = scmp.lt.s32.totalorder %s24, 0
      %s26 = scalar_select %p25, %s24, 0
      %s27 = smul.addr %s26, 8
      %s28 = scalar_lea.vmem %s1, %s27
      %s29 = sadd.s32 0, 0
      %p30 = scmp.lt.s32.totalorder %s29, 0
      %s31 = scalar_select %p30, %s29, 0
    $region9: #{tpu_custom_call.1} parent=1 // pred_fallthru
      _
    %s32 = sadd.s32 0, 0
    %p33 = scmp.lt.s32.totalorder %s32, 0
    %s34 = scalar_select %p33, %s32, 0
    %p35 = scmp.lt.s32.totalorder %s34, 0
    %s36 = scalar_select %p35, %s34, 0
    %s37 = smul.addr %s36, 8
    %s38 = scalar_lea.vmem %s0, %s37
    %s39 = sadd.s32 0, 0
    %p40 = scmp.lt.s32.totalorder %s39, 0
    %s41 = scalar_select %p40, %s39, 0
    %p42 = scmp.lt.s32.totalorder %s41, 0
    %s43 = scalar_select %p42, %s41, 0
    %s44 = smul.addr %s43, 8
    %s45 = scalar_lea.vmem %s1, %s44
    %s46 = sadd.s32 0, 0
    %p47 = scmp.lt.s32.totalorder %s46, 0
    %s48 = scalar_select %p47, %s46, 0
    %p49 = scmp.lt.s32.totalorder %s48, 0
    %s50 = scalar_select %p49, %s48, 0
    %s51 = smul.addr %s50, 8
    %s52 = scalar_lea.vmem %s0, %s51
    %s53 = sadd.s32 0, 0
    %p54 = scmp.lt.s32.totalorder %s53, 0
    %s55 = scalar_select %p54, %s53, 0
    %s56 = sadd.s32 0, 0
    %p57 = scmp.lt.s32.totalorder %s56, 0
    %s58 = scalar_select %p57, %s56, 0
    %p59 = scmp.lt.s32.totalorder %s58, 0
    %s60 = scalar_select %p59, %s58, 0
    %s61 = smul.addr %s60, 8
    %s62 = scalar_lea.vmem %s1, %s61
    %s63 = sadd.s32 0, 0
    %p64 = scmp.lt.s32.totalorder %s63, 0
    %s65 = scalar_select %p64, %s63, 0
    %p66 = scmp.eq.s32.totalorder 0, 0
    // Predicated region
    $region10: #{tpu_custom_call.1} parent=1 // pred_check
      %p67 = pneg %p66
    $region11: #{tpu_custom_call.1} parent=1 // pred_check_branch
      %69 = sbr.rel (%p67) target = $region13
    $region12: #{tpu_custom_call.1} parent=1 // pred_region
      %70 = vst [vmem:[#allocation2] sm:$0xff] 0.0
    $region13: #{tpu_custom_call.1} parent=1 // pred_fallthru
      _
    %v71 = vld [vmem:[%s52] sm:$0xff]
    %v72 = vld [vmem:[%s62] sm:$0xff]
    %vm73 = vcmask 261120
    %v74 = vsel %vm73, %v71, -inf
    %75 = vmax.xlane.f32.xlu0 %v74
    %v76 = vpop.xlane.xlu0 %75
    %v77 = vsub.f32 %v71, %v76
    %v78 = vmul.f32 %v77, 1.442695
    %v79 = vpow.pop %v78
    %v80 = vsel %vm73, %v79, 0.0
    %81 = vadd.xlane.f32.xlu0 %v80
    %v82 = vpop.xlane.xlu0 %81
    %v83 = vlaneseq
    %v84 = vand.u32 %v83, 127
    %85 = vset.pattern.permute.xlu0 0
    %86 = vperm.xlu0 %85, %v72
    %v87 = vpop.permute.xlu0 %86
    %vm88 = vcmp.eq.s32.totalorder %v84, %v87
    %v89 = vsel %vm88, %v77, 0.0
    %v90 = vsel %vm73, %v89, 0.0
    %91 = vadd.xlane.f32.xlu0 %v90
    %v92 = vpop.xlane.xlu0 %91
    %v93 = vlog2.pop %v82
    %v94 = vmul.f32 %v93, 0.6931472
    %v95 = vsub.f32 %v94, %v92
    %s96 = sadd.s32 0, 0
    %s97 = smul.u32 %s96, 8
    %v98 = vlaneseq
    %v99 = vshrl.u32 %v98, 7
    %v100 = vstv %s97
    %v101 = vadd.s32 %v100, %v99
    %vm102 = vcmp.lt.s32.totalorder %v101, 8
    %v103 = vsel %vm102, %v95, 0.0
    %v104 = vld [vmem:[#allocation2] sm:$0xff]
    %vm105 = vcmask 7168
    %v106 = vsel %vm105, %v103, 0.0
    %107 = vadd.xlane.f32.xlu0 %v106
    %v108 = vpop.xlane.xlu0 %107
    %v109 = vrot.slane %v108, 4
    %v110 = vadd.f32 %v108, %v109
    %v111 = vrot.slane %v110, 2
    %v112 = vadd.f32 %v110, %v111
    %v113 = vrot.slane %v112, 1
    %v114 = vadd.f32 %v112, %v113
    %s115 = vtos %v114
    %v116 = vstv %s115
    %v117 = vadd.f32 %v104, %v116
    %118 = vst [vmem:[#allocation2] sm:$0xff] %v117
    // Predicated region
    $region14: #{tpu_custom_call.1} parent=1 // pred_check
      _
    $region15: #{tpu_custom_call.1} parent=1 // pred_check_branch
      %120 = sbr.rel (0) target = $region17
    $region16: #{tpu_custom_call.1} parent=1 // pred_region
      %s122 = ssub.s32 128, 128
      %123 = vsyncadd [#allocation3], %s122
      %s125 = sshll.u32 [#allocation2], 4
      %s126 = int_to_ptr.vmem [resolvable:$true] %s125
      %128 = dma.vmem_to_hbm [thread:$0]  %s126, 128, %s2, [#allocation3]
    $region17: #{tpu_custom_call.1} parent=1 // pred_fallthru
      _
    // Predicated region
    $region18: #{tpu_custom_call.1} parent=1 // pred_check
      _
    $region19: #{tpu_custom_call.1} parent=1 // pred_check_branch
      %130 = sbr.rel (0) target = $region21
    $region20: #{tpu_custom_call.1} parent=1 // pred_region
      %131 = dma.done [#allocation3], 128
    $region21: #{tpu_custom_call.1} parent=1 // pred_fallthru
      _
    %132 = vsyncpa [#allocation3], 1

</llo_original>
